<compile_context>
chip_gen: v5e
topology: v5e:2x2
jax: 0.10.0
libtpu: 0.0.40
codegen_flags: <defaults>
</compile_context>

<pallas_src>
import math

import jax
import jax.numpy as jnp
from jax.experimental import pallas as pl
from jax.experimental.pallas import tpu as pltpu


def make_pma_kernel(dim, num_heads, num_seeds, n_set, bt):
    ds = dim // num_heads

    def kernel(s_ref, x_ref, wq_ref, bq_ref, wk_ref, bk_ref,
               wv_ref, bv_ref, wo_ref, bo_ref, o_ref, acc_ref):
        # bf16 operands on the MXU, f32 accumulation.
        S = s_ref[...]                                # (num_seeds, dim) bf16
        X = x_ref[...]                                # (bt*n_set, dim)   bf16

        Q = jnp.dot(S, wq_ref[...], preferred_element_type=jnp.float32) + bq_ref[...]
        # wk/bk are pre-scaled by 1/sqrt(dim) in the wrapper.
        K = jnp.dot(X, wk_ref[...], preferred_element_type=jnp.float32) + bk_ref[...]
        V = jnp.dot(X, wv_ref[...], preferred_element_type=jnp.float32) + bv_ref[...]

        # Tiny per-(head, batch) attention; results written in place into the
        # f32 scratch (no concat, no list of live head outputs).
        for h in range(num_heads):
            lo = h * ds
            Qh = Q[:, lo:lo + ds]                     # shared across batch
            for b in range(bt):
                r0 = b * n_set
                Kb = K[r0:r0 + n_set, lo:lo + ds]     # (n_set, ds), already scaled
                Vb = V[r0:r0 + n_set, lo:lo + ds]
                s = jnp.dot(Qh, Kb.T, preferred_element_type=jnp.float32)
                m = jnp.max(s, axis=-1, keepdims=True)
                p = jnp.exp(s - m)
                denom = jnp.sum(p, axis=-1, keepdims=True)
                pv = jnp.dot(p, Vb, preferred_element_type=jnp.float32)
                o_bh = Qh + pv * pl.reciprocal(denom, approx=True)
                acc_ref[b * num_seeds:(b + 1) * num_seeds, lo:lo + ds] = o_bh

        # O = O + sigmoid(fc_o(O)), done once for the whole batch block.
        O = acc_ref[...]                              # (bt*num_seeds, dim) f32
        gate = jax.nn.sigmoid(
            jnp.dot(O.astype(jnp.bfloat16), wo_ref[...],
                    preferred_element_type=jnp.float32) + bo_ref[...])
        o_ref[...] = (O + gate).astype(o_ref.dtype)

    return kernel


def _pick_batch_block(B, N, num_seeds, target):
    """Largest divisor of B <= target that keeps block sublane dims aligned and,
    when possible, keeps >= 2 grid steps (megacore / 2-TC sharding)."""
    candidates = []
    for bt in range(1, B + 1):
        if B % bt:
            continue
        ok_x = (bt * N) % 8 == 0 or bt == B
        ok_o = (bt * num_seeds) % 8 == 0 or bt == B
        if ok_x and ok_o:
            candidates.append(bt)
    pref = [bt for bt in candidates if bt <= target and B // bt >= 2]
    if pref:
        return max(pref)
    small = [bt for bt in candidates if bt <= target]
    return max(small) if small else max(candidates)


def pma_forward(X, S, params, num_heads, batch_block=None):
    """X: (B, N, dim), S: (num_seeds, dim). Returns (B, num_seeds, dim)."""
    B, N, dim = X.shape
    num_seeds = S.shape[0]
    assert dim % num_heads == 0, "dim must be divisible by num_heads"
    wq, bq, wk, bk, wv, bv, wo, bo = params
    out_dtype = X.dtype

    if batch_block is None:
        batch_block = max(1, min(32, -(-256 // N)))   # aim for bt*N ~ 256 (MXU M)
    bt = _pick_batch_block(B, N, num_seeds, batch_block)
    grid = B // bt

    scale = 1.0 / math.sqrt(dim)
    bf16 = jnp.bfloat16
    # Pre-transpose weights, cast MXU operands to bf16, fold 1/sqrt(dim) into K.
    wqT = wq.T.astype(bf16)
    wkT = (wk * scale).T.astype(bf16)
    wvT = wv.T.astype(bf16)
    woT = wo.T.astype(bf16)
    bq32 = bq.astype(jnp.float32).reshape(1, dim)
    bk32 = (bk * scale).astype(jnp.float32).reshape(1, dim)
    bv32 = bv.astype(jnp.float32).reshape(1, dim)
    bo32 = bo.astype(jnp.float32).reshape(1, dim)
    S16 = S.astype(bf16)
    Xf = X.reshape(B * N, dim).astype(bf16)           # flat rows; free XLA reshape

    kernel = make_pma_kernel(dim, num_heads, num_seeds, N, bt)
    shared = lambda shape: pl.BlockSpec(shape, lambda i: (0, 0))

    # Rough double-buffered VMEM estimate -> explicit limit, capped for v7x (64 MiB).
    est = (2 * bt * N * dim * 2
           + 2 * bt * num_seeds * dim * jnp.dtype(out_dtype).itemsize
           + 2 * (4 * dim * dim * 2 + 4 * dim * 4 + num_seeds * dim * 2)
           + bt * num_seeds * dim * 4)
    vmem_limit = int(min(64 * 2**20, max(32 * 2**20, 2 * est)))

    out_flat = pl.pallas_call(
        kernel,
        out_shape=jax.ShapeDtypeStruct((B * num_seeds, dim), out_dtype),
        grid_spec=pltpu.PrefetchScalarGridSpec(
            num_scalar_prefetch=0,
            grid=(grid,),
            in_specs=[
                shared((num_seeds, dim)),                          # S (shared)
                pl.BlockSpec((bt * N, dim), lambda i: (i, 0)),     # X rows for block i
                shared((dim, dim)), shared((1, dim)),              # WqT, bq
                shared((dim, dim)), shared((1, dim)),              # WkT, bk (scaled)
                shared((dim, dim)), shared((1, dim)),              # WvT, bv
                shared((dim, dim)), shared((1, dim)),              # WoT, bo
            ],
            out_specs=pl.BlockSpec((bt * num_seeds, dim), lambda i: (i, 0)),
            scratch_shapes=[pltpu.VMEM((bt * num_seeds, dim), jnp.float32)],
        ),
        compiler_params=pltpu.CompilerParams(
            dimension_semantics=("parallel",),
            vmem_limit_bytes=vmem_limit),
    )(S16, Xf, wqT, bq32, wkT, bk32, wvT, bv32, woT, bo32)

    return out_flat.reshape(B, num_seeds, dim)


def pma_reference(X, S, params, num_heads):
    """Pure-JAX f32 reference mirroring the PyTorch forward (ln=False)."""
    wq, bq, wk, bk, wv, bv, wo, bo = params
    B, N, dim = X.shape
    num_seeds = S.shape[0]
    ds = dim // num_heads

    Srep = jnp.broadcast_to(S[None], (B, num_seeds, dim))
    Q = Srep @ wq.T + bq[0]
    K = X @ wk.T + bk[0]
    V = X @ wv.T + bv[0]

    Q_ = jnp.concatenate([Q[..., h * ds:(h + 1) * ds] for h in range(num_heads)], 0)
    K_ = jnp.concatenate([K[..., h * ds:(h + 1) * ds] for h in range(num_heads)], 0)
    V_ = jnp.concatenate([V[..., h * ds:(h + 1) * ds] for h in range(num_heads)], 0)

    A = jax.nn.softmax(jnp.einsum('bqd,bkd->bqk', Q_, K_) / math.sqrt(dim), axis=2)
    O_ = Q_ + jnp.einsum('bqk,bkd->bqd', A, V_)
    O = jnp.concatenate([O_[h * B:(h + 1) * B] for h in range(num_heads)], 2)
    O = O + jax.nn.sigmoid(O @ wo.T + bo[0])
    return O


def init_params(key, dim, num_seeds):
    ks = jax.random.split(key, 9)
    bound_s = math.sqrt(6.0 / (num_seeds * dim + dim))
    S = jax.random.uniform(ks[0], (num_seeds, dim), jnp.float32, -bound_s, bound_s)
    bnd = 1.0 / math.sqrt(dim)
    def lin(kw, kb):
        w = jax.random.uniform(kw, (dim, dim), jnp.float32, -bnd, bnd)
        b = jax.random.uniform(kb, (1, dim), jnp.float32, -bnd, bnd)
        return w, b
    wq, bq = lin(ks[1], ks[2])
    wk, bk = lin(ks[3], ks[4])
    wv, bv = lin(ks[5], ks[6])
    wo, bo = lin(ks[7], ks[8])
    return S, (wq, bq, wk, bk, wv, bv, wo, bo)


if __name__ == "__main__":
    B, N, dim = 2, 16, 32
    num_heads, num_seeds = 4, 8

    key = jax.random.PRNGKey(0)
    k_param, k_x = jax.random.split(key)
    S, params = init_params(k_param, dim, num_seeds)
    X = jax.random.normal(k_x, (B, N, dim), jnp.float32)

    out = pma_forward(X, S, params, num_heads)
    out = jax.block_until_ready(out)

    ref = pma_reference(X, S, params, num_heads)
    assert out.shape == (B, num_seeds, dim)
    # bf16 MXU operands (f32 accumulation) -> loosened tolerance vs f32 reference.
    assert jnp.allclose(out, ref, atol=3e-2, rtol=3e-2), "mismatch vs reference"

    print("KERNEL_OK")
</pallas_src>

<mosaic_0001>
module attributes {stable_mosaic.version = 11 : i64} {
  func.func @kernel(%arg0: i32, %arg1: memref<8x32xbf16, #tpu.memory_space<vmem>>, %arg2: memref<16x32xbf16, #tpu.memory_space<vmem>>, %arg3: memref<32x32xbf16, #tpu.memory_space<vmem>>, %arg4: memref<1x32xf32, #tpu.memory_space<vmem>>, %arg5: memref<32x32xbf16, #tpu.memory_space<vmem>>, %arg6: memref<1x32xf32, #tpu.memory_space<vmem>>, %arg7: memref<32x32xbf16, #tpu.memory_space<vmem>>, %arg8: memref<1x32xf32, #tpu.memory_space<vmem>>, %arg9: memref<32x32xbf16, #tpu.memory_space<vmem>>, %arg10: memref<1x32xf32, #tpu.memory_space<vmem>>, %arg11: memref<8x32xf32, #tpu.memory_space<vmem>>, %arg12: memref<8x32xf32, #tpu.memory_space<vmem>>) attributes {dimension_semantics = [#tpu.dimension_semantics<parallel>], iteration_bounds = array<i64: 2>, scalar_prefetch = 0 : i64, scratch_operands = 1 : i64, tpu.core_type = #tpu.core_type<tc>, window_params = [{pipeline_mode = #tpu.pipeline_mode<synchronous>, transform_indices = @transform_0, window_bounds = array<i64: 8, 32>}, {transform_indices = @transform_1, window_bounds = array<i64: 16, 32>}, {pipeline_mode = #tpu.pipeline_mode<synchronous>, transform_indices = @transform_2, window_bounds = array<i64: 32, 32>}, {pipeline_mode = #tpu.pipeline_mode<synchronous>, transform_indices = @transform_3, window_bounds = array<i64: 1, 32>}, {pipeline_mode = #tpu.pipeline_mode<synchronous>, transform_indices = @transform_4, window_bounds = array<i64: 32, 32>}, {pipeline_mode = #tpu.pipeline_mode<synchronous>, transform_indices = @transform_5, window_bounds = array<i64: 1, 32>}, {pipeline_mode = #tpu.pipeline_mode<synchronous>, transform_indices = @transform_6, window_bounds = array<i64: 32, 32>}, {pipeline_mode = #tpu.pipeline_mode<synchronous>, transform_indices = @transform_7, window_bounds = array<i64: 1, 32>}, {pipeline_mode = #tpu.pipeline_mode<synchronous>, transform_indices = @transform_8, window_bounds = array<i64: 32, 32>}, {pipeline_mode = #tpu.pipeline_mode<synchronous>, transform_indices = @transform_9, window_bounds = array<i64: 1, 32>}, {transform_indices = @transform_10, window_bounds = array<i64: 8, 32>}]} {
    %c0 = arith.constant 0 : index
    %c0_0 = arith.constant 0 : index
    %0 = vector.load %arg1[%c0, %c0_0] : memref<8x32xbf16, #tpu.memory_space<vmem>>, vector<8x32xbf16>
    %c0_1 = arith.constant 0 : index
    %c0_2 = arith.constant 0 : index
    %1 = vector.load %arg2[%c0_1, %c0_2] : memref<16x32xbf16, #tpu.memory_space<vmem>>, vector<16x32xbf16>
    %c0_3 = arith.constant 0 : index
    %c0_4 = arith.constant 0 : index
    %2 = vector.load %arg3[%c0_3, %c0_4] : memref<32x32xbf16, #tpu.memory_space<vmem>>, vector<32x32xbf16>
    %cst = arith.constant dense<0.000000e+00> : vector<8x32xf32>
    %3 = tpu.matmul %0, %2, %cst {dimension_numbers = #tpu.dot_dimension_numbers<[1], [0], [0], [1], [0, 0, 1, 1], [], []>} : vector<8x32xbf16>, vector<32x32xbf16>, vector<8x32xf32> -> vector<8x32xf32>
    %c0_5 = arith.constant 0 : index
    %c0_6 = arith.constant 0 : index
    %4 = vector.load %arg4[%c0_5, %c0_6] : memref<1x32xf32, #tpu.memory_space<vmem>>, vector<1x32xf32>
    %5 = vector.broadcast %4 : vector<1x32xf32> to vector<8x32xf32>
    %6 = arith.addf %3, %5 : vector<8x32xf32>
    %c0_7 = arith.constant 0 : index
    %c0_8 = arith.constant 0 : index
    %7 = vector.load %arg5[%c0_7, %c0_8] : memref<32x32xbf16, #tpu.memory_space<vmem>>, vector<32x32xbf16>
    %cst_9 = arith.constant dense<0.000000e+00> : vector<16x32xf32>
    %8 = tpu.matmul %1, %7, %cst_9 {dimension_numbers = #tpu.dot_dimension_numbers<[1], [0], [0], [1], [0, 0, 1, 1], [], []>} : vector<16x32xbf16>, vector<32x32xbf16>, vector<16x32xf32> -> vector<16x32xf32>
    %c0_10 = arith.constant 0 : index
    %c0_11 = arith.constant 0 : index
    %9 = vector.load %arg6[%c0_10, %c0_11] : memref<1x32xf32, #tpu.memory_space<vmem>>, vector<1x32xf32>
    %10 = vector.broadcast %9 : vector<1x32xf32> to vector<16x32xf32>
    %11 = arith.addf %8, %10 : vector<16x32xf32>
    %c0_12 = arith.constant 0 : index
    %c0_13 = arith.constant 0 : index
    %12 = vector.load %arg7[%c0_12, %c0_13] : memref<32x32xbf16, #tpu.memory_space<vmem>>, vector<32x32xbf16>
    %cst_14 = arith.constant dense<0.000000e+00> : vector<16x32xf32>
    %13 = tpu.matmul %1, %12, %cst_14 {dimension_numbers = #tpu.dot_dimension_numbers<[1], [0], [0], [1], [0, 0, 1, 1], [], []>} : vector<16x32xbf16>, vector<32x32xbf16>, vector<16x32xf32> -> vector<16x32xf32>
    %c0_15 = arith.constant 0 : index
    %c0_16 = arith.constant 0 : index
    %14 = vector.load %arg8[%c0_15, %c0_16] : memref<1x32xf32, #tpu.memory_space<vmem>>, vector<1x32xf32>
    %15 = vector.broadcast %14 : vector<1x32xf32> to vector<16x32xf32>
    %16 = arith.addf %13, %15 : vector<16x32xf32>
    %17 = vector.extract_strided_slice %6 {offsets = [0, 0], sizes = [8, 8], strides = [1, 1]} : vector<8x32xf32> to vector<8x8xf32>
    %18 = vector.extract_strided_slice %11 {offsets = [0, 0], sizes = [16, 8], strides = [1, 1]} : vector<16x32xf32> to vector<16x8xf32>
    %19 = vector.extract_strided_slice %16 {offsets = [0, 0], sizes = [16, 8], strides = [1, 1]} : vector<16x32xf32> to vector<16x8xf32>
    %20 = tpu.transpose %18, [1, 0] : vector<16x8xf32> -> vector<8x16xf32>
    %cst_17 = arith.constant dense<0.000000e+00> : vector<8x16xf32>
    %21 = tpu.matmul %17, %20, %cst_17 {dimension_numbers = #tpu.dot_dimension_numbers<[1], [0], [0], [1], [0, 0, 1, 1], [], []>} : vector<8x8xf32>, vector<8x16xf32>, vector<8x16xf32> -> vector<8x16xf32>
    %cst_18 = arith.constant dense<0xFF800000> : vector<8xf32>
    %22 = vector.multi_reduction <maximumf>, %21, %cst_18 [1] : vector<8x16xf32> to vector<8xf32>
    %23 = vector.shape_cast %22 : vector<8xf32> to vector<8x1xf32>
    %24 = vector.broadcast %23 : vector<8x1xf32> to vector<8x16xf32>
    %25 = arith.subf %21, %24 : vector<8x16xf32>
    %26 = math.exp %25 : vector<8x16xf32>
    %cst_19 = arith.constant dense<0.000000e+00> : vector<8xf32>
    %27 = vector.multi_reduction <add>, %26, %cst_19 [1] : vector<8x16xf32> to vector<8xf32>
    %28 = vector.shape_cast %27 : vector<8xf32> to vector<8x1xf32>
    %cst_20 = arith.constant dense<0.000000e+00> : vector<8x8xf32>
    %29 = tpu.matmul %26, %19, %cst_20 {dimension_numbers = #tpu.dot_dimension_numbers<[1], [0], [0], [1], [0, 0, 1, 1], [], []>} : vector<8x16xf32>, vector<16x8xf32>, vector<8x8xf32> -> vector<8x8xf32>
    %30 = tpu.reciprocal %28 {approx = true} : vector<8x1xf32> -> vector<8x1xf32>
    %31 = vector.broadcast %30 : vector<8x1xf32> to vector<8x8xf32>
    %32 = arith.mulf %29, %31 : vector<8x8xf32>
    %33 = arith.addf %17, %32 : vector<8x8xf32>
    %c0_21 = arith.constant 0 : index
    %c0_22 = arith.constant 0 : index
    %34 = vector.load %arg12[%c0_21, %c0_22] : memref<8x32xf32, #tpu.memory_space<vmem>>, vector<8x8xf32>
    tpu.vector_store %arg12[%c0_21, %c0_22], %33 {strides = array<i32>} : memref<8x32xf32, #tpu.memory_space<vmem>>, vector<8x8xf32>,
    %35 = vector.extract_strided_slice %6 {offsets = [0, 8], sizes = [8, 8], strides = [1, 1]} : vector<8x32xf32> to vector<8x8xf32>
    %36 = vector.extract_strided_slice %11 {offsets = [0, 8], sizes = [16, 8], strides = [1, 1]} : vector<16x32xf32> to vector<16x8xf32>
    %37 = vector.extract_strided_slice %16 {offsets = [0, 8], sizes = [16, 8], strides = [1, 1]} : vector<16x32xf32> to vector<16x8xf32>
    %38 = tpu.transpose %36, [1, 0] : vector<16x8xf32> -> vector<8x16xf32>
    %cst_23 = arith.constant dense<0.000000e+00> : vector<8x16xf32>
    %39 = tpu.matmul %35, %38, %cst_23 {dimension_numbers = #tpu.dot_dimension_numbers<[1], [0], [0], [1], [0, 0, 1, 1], [], []>} : vector<8x8xf32>, vector<8x16xf32>, vector<8x16xf32> -> vector<8x16xf32>
    %cst_24 = arith.constant dense<0xFF800000> : vector<8xf32>
    %40 = vector.multi_reduction <maximumf>, %39, %cst_24 [1] : vector<8x16xf32> to vector<8xf32>
    %41 = vector.shape_cast %40 : vector<8xf32> to vector<8x1xf32>
    %42 = vector.broadcast %41 : vector<8x1xf32> to vector<8x16xf32>
    %43 = arith.subf %39, %42 : vector<8x16xf32>
    %44 = math.exp %43 : vector<8x16xf32>
    %cst_25 = arith.constant dense<0.000000e+00> : vector<8xf32>
    %45 = vector.multi_reduction <add>, %44, %cst_25 [1] : vector<8x16xf32> to vector<8xf32>
    %46 = vector.shape_cast %45 : vector<8xf32> to vector<8x1xf32>
    %cst_26 = arith.constant dense<0.000000e+00> : vector<8x8xf32>
    %47 = tpu.matmul %44, %37, %cst_26 {dimension_numbers = #tpu.dot_dimension_numbers<[1], [0], [0], [1], [0, 0, 1, 1], [], []>} : vector<8x16xf32>, vector<16x8xf32>, vector<8x8xf32> -> vector<8x8xf32>
    %48 = tpu.reciprocal %46 {approx = true} : vector<8x1xf32> -> vector<8x1xf32>
    %49 = vector.broadcast %48 : vector<8x1xf32> to vector<8x8xf32>
    %50 = arith.mulf %47, %49 : vector<8x8xf32>
    %51 = arith.addf %35, %50 : vector<8x8xf32>
    %c0_27 = arith.constant 0 : index
    %c8 = arith.constant 8 : index
    %52 = vector.load %arg12[%c0_27, %c8] : memref<8x32xf32, #tpu.memory_space<vmem>>, vector<8x8xf32>
    tpu.vector_store %arg12[%c0_27, %c8], %51 {strides = array<i32>} : memref<8x32xf32, #tpu.memory_space<vmem>>, vector<8x8xf32>,
    %53 = vector.extract_strided_slice %6 {offsets = [0, 16], sizes = [8, 8], strides = [1, 1]} : vector<8x32xf32> to vector<8x8xf32>
    %54 = vector.extract_strided_slice %11 {offsets = [0, 16], sizes = [16, 8], strides = [1, 1]} : vector<16x32xf32> to vector<16x8xf32>
    %55 = vector.extract_strided_slice %16 {offsets = [0, 16], sizes = [16, 8], strides = [1, 1]} : vector<16x32xf32> to vector<16x8xf32>
    %56 = tpu.transpose %54, [1, 0] : vector<16x8xf32> -> vector<8x16xf32>
    %cst_28 = arith.constant dense<0.000000e+00> : vector<8x16xf32>
    %57 = tpu.matmul %53, %56, %cst_28 {dimension_numbers = #tpu.dot_dimension_numbers<[1], [0], [0], [1], [0, 0, 1, 1], [], []>} : vector<8x8xf32>, vector<8x16xf32>, vector<8x16xf32> -> vector<8x16xf32>
    %cst_29 = arith.constant dense<0xFF800000> : vector<8xf32>
    %58 = vector.multi_reduction <maximumf>, %57, %cst_29 [1] : vector<8x16xf32> to vector<8xf32>
    %59 = vector.shape_cast %58 : vector<8xf32> to vector<8x1xf32>
    %60 = vector.broadcast %59 : vector<8x1xf32> to vector<8x16xf32>
    %61 = arith.subf %57, %60 : vector<8x16xf32>
    %62 = math.exp %61 : vector<8x16xf32>
    %cst_30 = arith.constant dense<0.000000e+00> : vector<8xf32>
    %63 = vector.multi_reduction <add>, %62, %cst_30 [1] : vector<8x16xf32> to vector<8xf32>
    %64 = vector.shape_cast %63 : vector<8xf32> to vector<8x1xf32>
    %cst_31 = arith.constant dense<0.000000e+00> : vector<8x8xf32>
    %65 = tpu.matmul %62, %55, %cst_31 {dimension_numbers = #tpu.dot_dimension_numbers<[1], [0], [0], [1], [0, 0, 1, 1], [], []>} : vector<8x16xf32>, vector<16x8xf32>, vector<8x8xf32> -> vector<8x8xf32>
    %66 = tpu.reciprocal %64 {approx = true} : vector<8x1xf32> -> vector<8x1xf32>
    %67 = vector.broadcast %66 : vector<8x1xf32> to vector<8x8xf32>
    %68 = arith.mulf %65, %67 : vector<8x8xf32>
    %69 = arith.addf %53, %68 : vector<8x8xf32>
    %c0_32 = arith.constant 0 : index
    %c16 = arith.constant 16 : index
    %70 = vector.load %arg12[%c0_32, %c16] : memref<8x32xf32, #tpu.memory_space<vmem>>, vector<8x8xf32>
    tpu.vector_store %arg12[%c0_32, %c16], %69 {strides = array<i32>} : memref<8x32xf32, #tpu.memory_space<vmem>>, vector<8x8xf32>,
    %71 = vector.extract_strided_slice %6 {offsets = [0, 24], sizes = [8, 8], strides = [1, 1]} : vector<8x32xf32> to vector<8x8xf32>
    %72 = vector.extract_strided_slice %11 {offsets = [0, 24], sizes = [16, 8], strides = [1, 1]} : vector<16x32xf32> to vector<16x8xf32>
    %73 = vector.extract_strided_slice %16 {offsets = [0, 24], sizes = [16, 8], strides = [1, 1]} : vector<16x32xf32> to vector<16x8xf32>
    %74 = tpu.transpose %72, [1, 0] : vector<16x8xf32> -> vector<8x16xf32>
    %cst_33 = arith.constant dense<0.000000e+00> : vector<8x16xf32>
    %75 = tpu.matmul %71, %74, %cst_33 {dimension_numbers = #tpu.dot_dimension_numbers<[1], [0], [0], [1], [0, 0, 1, 1], [], []>} : vector<8x8xf32>, vector<8x16xf32>, vector<8x16xf32> -> vector<8x16xf32>
    %cst_34 = arith.constant dense<0xFF800000> : vector<8xf32>
    %76 = vector.multi_reduction <maximumf>, %75, %cst_34 [1] : vector<8x16xf32> to vector<8xf32>
    %77 = vector.shape_cast %76 : vector<8xf32> to vector<8x1xf32>
    %78 = vector.broadcast %77 : vector<8x1xf32> to vector<8x16xf32>
    %79 = arith.subf %75, %78 : vector<8x16xf32>
    %80 = math.exp %79 : vector<8x16xf32>
    %cst_35 = arith.constant dense<0.000000e+00> : vector<8xf32>
    %81 = vector.multi_reduction <add>, %80, %cst_35 [1] : vector<8x16xf32> to vector<8xf32>
    %82 = vector.shape_cast %81 : vector<8xf32> to vector<8x1xf32>
    %cst_36 = arith.constant dense<0.000000e+00> : vector<8x8xf32>
    %83 = tpu.matmul %80, %73, %cst_36 {dimension_numbers = #tpu.dot_dimension_numbers<[1], [0], [0], [1], [0, 0, 1, 1], [], []>} : vector<8x16xf32>, vector<16x8xf32>, vector<8x8xf32> -> vector<8x8xf32>
    %84 = tpu.reciprocal %82 {approx = true} : vector<8x1xf32> -> vector<8x1xf32>
    %85 = vector.broadcast %84 : vector<8x1xf32> to vector<8x8xf32>
    %86 = arith.mulf %83, %85 : vector<8x8xf32>
    %87 = arith.addf %71, %86 : vector<8x8xf32>
    %c0_37 = arith.constant 0 : index
    %c24 = arith.constant 24 : index
    %88 = vector.load %arg12[%c0_37, %c24] : memref<8x32xf32, #tpu.memory_space<vmem>>, vector<8x8xf32>
    tpu.vector_store %arg12[%c0_37, %c24], %87 {strides = array<i32>} : memref<8x32xf32, #tpu.memory_space<vmem>>, vector<8x8xf32>,
    %c0_38 = arith.constant 0 : index
    %c0_39 = arith.constant 0 : index
    %89 = vector.load %arg12[%c0_38, %c0_39] : memref<8x32xf32, #tpu.memory_space<vmem>>, vector<8x32xf32>
    %90 = arith.truncf %89 : vector<8x32xf32> to vector<8x32xbf16>
    %c0_40 = arith.constant 0 : index
    %c0_41 = arith.constant 0 : index
    %91 = vector.load %arg9[%c0_40, %c0_41] : memref<32x32xbf16, #tpu.memory_space<vmem>>, vector<32x32xbf16>
    %cst_42 = arith.constant dense<0.000000e+00> : vector<8x32xf32>
    %92 = tpu.matmul %90, %91, %cst_42 {dimension_numbers = #tpu.dot_dimension_numbers<[1], [0], [0], [1], [0, 0, 1, 1], [], []>} : vector<8x32xbf16>, vector<32x32xbf16>, vector<8x32xf32> -> vector<8x32xf32>
    %c0_43 = arith.constant 0 : index
    %c0_44 = arith.constant 0 : index
    %93 = vector.load %arg10[%c0_43, %c0_44] : memref<1x32xf32, #tpu.memory_space<vmem>>, vector<1x32xf32>
    %94 = vector.broadcast %93 : vector<1x32xf32> to vector<8x32xf32>
    %95 = arith.addf %92, %94 : vector<8x32xf32>
    %96 = arith.negf %95 : vector<8x32xf32>
    %97 = math.exp %96 : vector<8x32xf32>
    %cst_45 = arith.constant 1.000000e+00 : f32
    %98 = vector.broadcast %cst_45 : f32 to vector<8x32xf32>
    %99 = arith.addf %98, %97 : vector<8x32xf32>
    %100 = arith.divf %98, %99 : vector<8x32xf32>
    %101 = arith.addf %89, %100 : vector<8x32xf32>
    %c0_46 = arith.constant 0 : index
    %c0_47 = arith.constant 0 : index
    %102 = vector.load %arg11[%c0_46, %c0_47] : memref<8x32xf32, #tpu.memory_space<vmem>>, vector<8x32xf32>
    tpu.vector_store %arg11[%c0_46, %c0_47], %101 {strides = array<i32>} : memref<8x32xf32, #tpu.memory_space<vmem>>, vector<8x32xf32>,
    return
  }
  func.func @transform_0(%arg0: i32) -> (i32, i32) {
    %c0_i32 = arith.constant 0 : i32
    %c0_i32_0 = arith.constant 0 : i32
    %c0_i32_1 = arith.constant 0 : i32
    return %c0_i32, %c0_i32_0 : i32, i32
  }
  func.func @transform_1(%arg0: i32) -> (i32, i32) {
    %c0_i32 = arith.constant 0 : i32
    %c0_i32_0 = arith.constant 0 : i32
    return %arg0, %c0_i32 : i32, i32
  }
  func.func @transform_2(%arg0: i32) -> (i32, i32) {
    %c0_i32 = arith.constant 0 : i32
    %c0_i32_0 = arith.constant 0 : i32
    %c0_i32_1 = arith.constant 0 : i32
    return %c0_i32, %c0_i32_0 : i32, i32
  }
  func.func @transform_3(%arg0: i32) -> (i32, i32) {
    %c0_i32 = arith.constant 0 : i32
    %c0_i32_0 = arith.constant 0 : i32
    %c0_i32_1 = arith.constant 0 : i32
    return %c0_i32, %c0_i32_0 : i32, i32
  }
  func.func @transform_4(%arg0: i32) -> (i32, i32) {
    %c0_i32 = arith.constant 0 : i32
    %c0_i32_0 = arith.constant 0 : i32
    %c0_i32_1 = arith.constant 0 : i32
    return %c0_i32, %c0_i32_0 : i32, i32
  }
  func.func @transform_5(%arg0: i32) -> (i32, i32) {
    %c0_i32 = arith.constant 0 : i32
    %c0_i32_0 = arith.constant 0 : i32
    %c0_i32_1 = arith.constant 0 : i32
    return %c0_i32, %c0_i32_0 : i32, i32
  }
  func.func @transform_6(%arg0: i32) -> (i32, i32) {
    %c0_i32 = arith.constant 0 : i32
    %c0_i32_0 = arith.constant 0 : i32
    %c0_i32_1 = arith.constant 0 : i32
    return %c0_i32, %c0_i32_0 : i32, i32
  }
  func.func @transform_7(%arg0: i32) -> (i32, i32) {
    %c0_i32 = arith.constant 0 : i32
    %c0_i32_0 = arith.constant 0 : i32
    %c0_i32_1 = arith.constant 0 : i32
    return %c0_i32, %c0_i32_0 : i32, i32
  }
  func.func @transform_8(%arg0: i32) -> (i32, i32) {
    %c0_i32 = arith.constant 0 : i32
    %c0_i32_0 = arith.constant 0 : i32
    %c0_i32_1 = arith.constant 0 : i32
    return %c0_i32, %c0_i32_0 : i32, i32
  }
  func.func @transform_9(%arg0: i32) -> (i32, i32) {
    %c0_i32 = arith.constant 0 : i32
    %c0_i32_0 = arith.constant 0 : i32
    %c0_i32_1 = arith.constant 0 : i32
    return %c0_i32, %c0_i32_0 : i32, i32
  }
  func.func @transform_10(%arg0: i32) -> (i32, i32) {
    %c0_i32 = arith.constant 0 : i32
    %c0_i32_0 = arith.constant 0 : i32
    return %arg0, %c0_i32 : i32, i32
  }
}

</mosaic_0001>

<llo_original>
// kernel: tpu_custom_call.1
$region0: #{tpu_custom_call.1}
  #allocation0 [shape = 'u32[]', space=smem, size = 0x4, offset = 0x4, fixed_abs, tag = 'smem constant byte address 0x4 - core index']
  #allocation1 [shape = 'u32[72,128]{1,0:T(1,128)}', space=vmem, size = 0x9000, scoped, tag = 'internal scratch']
  #allocation2 [shape = 'f32[8,32]{1,0:T(8,128)}', space=vmem, size = 0x1000, scoped, tag = 'scratch operand']
  %s0 = inlined_call_operand.hbm [shape: bf16[8,32], index: 0, kind: input, shape index: {}]
  %s1 = inlined_call_operand.hbm [shape: bf16[32,32], index: 1, kind: input, shape index: {}]
  %s2 = inlined_call_operand.hbm [shape: bf16[32,32], index: 2, kind: input, shape index: {}]
  %s3 = inlined_call_operand.vmem [shape: f32[1,32], index: 3, kind: input, shape index: {}]
  %s4 = inlined_call_operand.hbm [shape: bf16[32,32], index: 4, kind: input, shape index: {}]
  %s5 = inlined_call_operand.vmem [shape: f32[1,32], index: 5, kind: input, shape index: {}]
  %s6 = inlined_call_operand.hbm [shape: bf16[32,32], index: 6, kind: input, shape index: {}]
  %s7 = inlined_call_operand.vmem [shape: f32[1,32], index: 7, kind: input, shape index: {}]
  %s8 = inlined_call_operand.hbm [shape: bf16[32,32], index: 8, kind: input, shape index: {}]
  %s9 = inlined_call_operand.vmem [shape: f32[1,32], index: 9, kind: input, shape index: {}]
  %s10 = inlined_call_operand.hbm [shape: f32[16,32], index: 10, kind: output, shape index: {}]
  %s11 = sld [smem:[#allocation0]]
  $region97: #{tpu_custom_call.1} parent=0
    _
  %s13 = ssub.s32 1, %s11
  %s14 = scalar_select 0, %s13, %s11
  $region1: #{tpu_custom_call.1} parent=0
    #allocation3 [shape = 'u8[2048]{0}', space=vmem, size = 0x800, scoped, tag = 'input window, operand 0, single buffered']
    #allocation4 [shape = 's32[2]{0}', space=sflag, size = 0x8, scoped, tag = 'scoped memory for tpu_custom_call.1']
    #allocation5 [shape = 's32[2]{0}', space=sflag, size = 0x8, scoped, tag = 'scoped memory for tpu_custom_call.1']
    #allocation6 [shape = 'u8[8192]{0}', space=vmem, size = 0x2000, scoped, tag = 'input window, operand 1']
    #allocation7 [shape = 's32[2]{0}', space=sflag, size = 0x8, scoped, tag = 'scoped memory for tpu_custom_call.1']
    #allocation8 [shape = 'u8[8192]{0}', space=vmem, size = 0x2000, scoped, tag = 'input window, operand 2, single buffered']
    #allocation9 [shape = 'u8[8192]{0}', space=vmem, size = 0x2000, scoped, tag = 'input window, operand 4, single buffered']
    #allocation10 [shape = 's32[1]{0}', space=sflag, size = 0x4, scoped, tag = 'scoped memory for tpu_custom_call.1']
    #allocation11 [shape = 'u8[8192]{0}', space=vmem, size = 0x2000, scoped, tag = 'input window, operand 6, single buffered']
    #allocation12 [shape = 'u8[8192]{0}', space=vmem, size = 0x2000, scoped, tag = 'input window, operand 8, single buffered']
    #allocation13 [shape = 's32[1]{0}', space=sflag, size = 0x4, scoped, tag = 'scoped memory for tpu_custom_call.1']
    #allocation14 [shape = 'u8[8192]{0}', space=vmem, size = 0x2000, scoped, tag = 'output window, operand 0']
    %15 = vsyncpa [#allocation4], 0
    %16 = vsyncpa [#allocation7], 0
    %s17 = scalar_lea.sflag [#allocation7], 1
    %18 = vsyncpa %s17, 0
    %19 = vsyncpa [#allocation10], 0
    %20 = vsyncpa [#allocation13], 0
    %21 = vsyncpa [#allocation5], 0
    %s22 = scalar_lea.sflag [#allocation5], 1
    %23 = vsyncpa %s22, 0
    loop: start=0, step=1, limit=4
    $region2: #{tpu_custom_call.1} parent=1 // loop_pre_header
      _
    $region3: #{tpu_custom_call.1} parent=1 // loop_header
      %s25 = sphi 0, %s29
      %p26 = scmp.ge.s32.totalorder %s25, 4
      %s33 = sphi 0, %s33
      %s35 = sphi 0, %s33
      %s36 = sphi 0, %s35
      %s50 = sphi 0, %s36
      %s56 = sphi 0, %s58
      %s59 = sphi 0, %s56
      %s60 = sphi 0, %s59
      %s76 = sphi 0, %s60
      %s80 = sphi 0, %s80
      %s82 = sphi 0, %s80
      %s83 = sphi 0, %s82
      %s97 = sphi 0, %s83
      %s101 = sphi 0, %s101
      %s103 = sphi 0, %s101
      %s104 = sphi 0, %s103
      %s118 = sphi 0, %s104
      %s122 = sphi 0, %s122
      %s124 = sphi 0, %s122
      %s125 = sphi 0, %s124
      %s139 = sphi 0, %s125
      %s143 = sphi 0, %s143
      %s145 = sphi 0, %s143
      %s146 = sphi 0, %s145
      %s160 = sphi 0, %s146
      %s164 = sphi 0, %s164
      %s166 = sphi 0, %s164
      %s167 = sphi 0, %s166
      %s181 = sphi 0, %s167
      %s185 = sphi 0, %s185
      %s187 = sphi 0, %s185
      %s188 = sphi 0, %s187
      %s202 = sphi 0, %s188
      %s206 = sphi 0, %s206
      %s208 = sphi 0, %s206
      %s209 = sphi 0, %s208
      %s223 = sphi 0, %s209
      %s227 = sphi 0, %s227
      %s229 = sphi 0, %s227
      %s230 = sphi 0, %s229
      %s244 = sphi 0, %s230
      %s250 = sphi 0, %s252
      %s253 = sphi 0, %s250
      %s254 = sphi 0, %s253
      %s270 = sphi 0, %s254
    $region4: #{tpu_custom_call.1} parent=1 // loop_header_branch
      %28 = sbr.rel (%p26) target = $region8
    $region5: #{tpu_custom_call.1} parent=1 // loop_body
      %s30 = ssub.s32 %s25, 1
      %s31 = ssub.s32 %s25, 2
      %s32 = sadd.s32 %s25, 1
      %s34 = sadd.s32 %s33, 1
      %p37 = scmp.eq.s32.totalorder %s25, 1
      %p38 = scmp.ne.s32.totalorder %s33, %s35
      %p39 = scmp.eq.s32.totalorder %s25, 0
      %p40 = por %p38, %p39
      %p41 = scmp.ne.s32.totalorder %s33, %s35
      %p42 = scmp.eq.s32.totalorder %s30, 1
      %p43 = por %p41, %p42
      %p44 = scmp.ne.s32.totalorder %s35, %s36
      %p45 = scmp.eq.s32.totalorder %s30, 0
      %p46 = por %p44, %p45
      %p47 = scmp.ne.s32.totalorder %s35, %s36
      %p48 = scmp.eq.s32.totalorder %s31, 1
      %p49 = por %p47, %p48
      %p51 = scmp.ne.s32.totalorder %s36, %s50
      %p52 = scmp.eq.s32.totalorder %s31, 0
      %p53 = por %p51, %p52
      %s54 = ssub.s32 %s25, %s32
      %p55 = scmp.eq.s32.totalorder %s54, 0
      %s57 = sadd.s32 %s56, 1
      %s58 = scalar_select %p55, %s56, %s57
      %p61 = pneg %p55
      %p62 = scmp.eq.s32.totalorder %s25, 1
      %p63 = por %p61, %p62
      %p64 = scmp.ne.s32.totalorder %s56, %s59
      %p65 = scmp.eq.s32.totalorder %s25, 0
      %p66 = por %p64, %p65
      %p67 = scmp.ne.s32.totalorder %s56, %s59
      %p68 = scmp.eq.s32.totalorder %s30, 1
      %p69 = por %p67, %p68
      %p70 = scmp.ne.s32.totalorder %s59, %s60
      %p71 = scmp.eq.s32.totalorder %s30, 0
      %p72 = por %p70, %p71
      %p73 = scmp.ne.s32.totalorder %s59, %s60
      %p74 = scmp.eq.s32.totalorder %s31, 1
      %p75 = por %p73, %p74
      %p77 = scmp.ne.s32.totalorder %s60, %s76
      %p78 = scmp.eq.s32.totalorder %s31, 0
      %p79 = por %p77, %p78
      %s81 = sadd.s32 %s80, 1
      %p84 = scmp.eq.s32.totalorder %s25, 1
      %p85 = scmp.ne.s32.totalorder %s80, %s82
      %p86 = scmp.eq.s32.totalorder %s25, 0
      %p87 = por %p85, %p86
      %p88 = scmp.ne.s32.totalorder %s80, %s82
      %p89 = scmp.eq.s32.totalorder %s30, 1
      %p90 = por %p88, %p89
      %p91 = scmp.ne.s32.totalorder %s82, %s83
      %p92 = scmp.eq.s32.totalorder %s30, 0
      %p93 = por %p91, %p92
      %p94 = scmp.ne.s32.totalorder %s82, %s83
      %p95 = scmp.eq.s32.totalorder %s31, 1
      %p96 = por %p94, %p95
      %p98 = scmp.ne.s32.totalorder %s83, %s97
      %p99 = scmp.eq.s32.totalorder %s31, 0
      %p100 = por %p98, %p99
      %s102 = sadd.s32 %s101, 1
      %p105 = scmp.eq.s32.totalorder %s25, 1
      %p106 = scmp.ne.s32.totalorder %s101, %s103
      %p107 = scmp.eq.s32.totalorder %s25, 0
      %p108 = por %p106, %p107
      %p109 = scmp.ne.s32.totalorder %s101, %s103
      %p110 = scmp.eq.s32.totalorder %s30, 1
      %p111 = por %p109, %p110
      %p112 = scmp.ne.s32.totalorder %s103, %s104
      %p113 = scmp.eq.s32.totalorder %s30, 0
      %p114 = por %p112, %p113
      %p115 = scmp.ne.s32.totalorder %s103, %s104
      %p116 = scmp.eq.s32.totalorder %s31, 1
      %p117 = por %p115, %p116
      %p119 = scmp.ne.s32.totalorder %s104, %s118
      %p120 = scmp.eq.s32.totalorder %s31, 0
      %p121 = por %p119, %p120
      %s123 = sadd.s32 %s122, 1
      %p126 = scmp.eq.s32.totalorder %s25, 1
      %p127 = scmp.ne.s32.totalorder %s122, %s124
      %p128 = scmp.eq.s32.totalorder %s25, 0
      %p129 = por %p127, %p128
      %p130 = scmp.ne.s32.totalorder %s122, %s124
      %p131 = scmp.eq.s32.totalorder %s30, 1
      %p132 = por %p130, %p131
      %p133 = scmp.ne.s32.totalorder %s124, %s125
      %p134 = scmp.eq.s32.totalorder %s30, 0
      %p135 = por %p133, %p134
      %p136 = scmp.ne.s32.totalorder %s124, %s125
      %p137 = scmp.eq.s32.totalorder %s31, 1
      %p138 = por %p136, %p137
      %p140 = scmp.ne.s32.totalorder %s125, %s139
      %p141 = scmp.eq.s32.totalorder %s31, 0
      %p142 = por %p140, %p141
      %s144 = sadd.s32 %s143, 1
      %p147 = scmp.eq.s32.totalorder %s25, 1
      %p148 = scmp.ne.s32.totalorder %s143, %s145
      %p149 = scmp.eq.s32.totalorder %s25, 0
      %p150 = por %p148, %p149
      %p151 = scmp.ne.s32.totalorder %s143, %s145
      %p152 = scmp.eq.s32.totalorder %s30, 1
      %p153 = por %p151, %p152
      %p154 = scmp.ne.s32.totalorder %s145, %s146
      %p155 = scmp.eq.s32.totalorder %s30, 0
      %p156 = por %p154, %p155
      %p157 = scmp.ne.s32.totalorder %s145, %s146
      %p158 = scmp.eq.s32.totalorder %s31, 1
      %p159 = por %p157, %p158
      %p161 = scmp.ne.s32.totalorder %s146, %s160
      %p162 = scmp.eq.s32.totalorder %s31, 0
      %p163 = por %p161, %p162
      %s165 = sadd.s32 %s164, 1
      %p168 = scmp.eq.s32.totalorder %s25, 1
      %p169 = scmp.ne.s32.totalorder %s164, %s166
      %p170 = scmp.eq.s32.totalorder %s25, 0
      %p171 = por %p169, %p170
      %p172 = scmp.ne.s32.totalorder %s164, %s166
      %p173 = scmp.eq.s32.totalorder %s30, 1
      %p174 = por %p172, %p173
      %p175 = scmp.ne.s32.totalorder %s166, %s167
      %p176 = scmp.eq.s32.totalorder %s30, 0
      %p177 = por %p175, %p176
      %p178 = scmp.ne.s32.totalorder %s166, %s167
      %p179 = scmp.eq.s32.totalorder %s31, 1
      %p180 = por %p178, %p179
      %p182 = scmp.ne.s32.totalorder %s167, %s181
      %p183 = scmp.eq.s32.totalorder %s31, 0
      %p184 = por %p182, %p183
      %s186 = sadd.s32 %s185, 1
      %p189 = scmp.eq.s32.totalorder %s25, 1
      %p190 = scmp.ne.s32.totalorder %s185, %s187
      %p191 = scmp.eq.s32.totalorder %s25, 0
      %p192 = por %p190, %p191
      %p193 = scmp.ne.s32.totalorder %s185, %s187
      %p194 = scmp.eq.s32.totalorder %s30, 1
      %p195 = por %p193, %p194
      %p196 = scmp.ne.s32.totalorder %s187, %s188
      %p197 = scmp.eq.s32.totalorder %s30, 0
      %p198 = por %p196, %p197
      %p199 = scmp.ne.s32.totalorder %s187, %s188
      %p200 = scmp.eq.s32.totalorder %s31, 1
      %p201 = por %p199, %p200
      %p203 = scmp.ne.s32.totalorder %s188, %s202
      %p204 = scmp.eq.s32.totalorder %s31, 0
      %p205 = por %p203, %p204
      %s207 = sadd.s32 %s206, 1
      %p210 = scmp.eq.s32.totalorder %s25, 1
      %p211 = scmp.ne.s32.totalorder %s206, %s208
      %p212 = scmp.eq.s32.totalorder %s25, 0
      %p213 = por %p211, %p212
      %p214 = scmp.ne.s32.totalorder %s206, %s208
      %p215 = scmp.eq.s32.totalorder %s30, 1
      %p216 = por %p214, %p215
      %p217 = scmp.ne.s32.totalorder %s208, %s209
      %p218 = scmp.eq.s32.totalorder %s30, 0
      %p219 = por %p217, %p218
      %p220 = scmp.ne.s32.totalorder %s208, %s209
      %p221 = scmp.eq.s32.totalorder %s31, 1
      %p222 = por %p220, %p221
      %p224 = scmp.ne.s32.totalorder %s209, %s223
      %p225 = scmp.eq.s32.totalorder %s31, 0
      %p226 = por %p224, %p225
      %s228 = sadd.s32 %s227, 1
      %p231 = scmp.eq.s32.totalorder %s25, 1
      %p232 = scmp.ne.s32.totalorder %s227, %s229
      %p233 = scmp.eq.s32.totalorder %s25, 0
      %p234 = por %p232, %p233
      %p235 = scmp.ne.s32.totalorder %s227, %s229
      %p236 = scmp.eq.s32.totalorder %s30, 1
      %p237 = por %p235, %p236
      %p238 = scmp.ne.s32.totalorder %s229, %s230
      %p239 = scmp.eq.s32.totalorder %s30, 0
      %p240 = por %p238, %p239
      %p241 = scmp.ne.s32.totalorder %s229, %s230
      %p242 = scmp.eq.s32.totalorder %s31, 1
      %p243 = por %p241, %p242
      %p245 = scmp.ne.s32.totalorder %s230, %s244
      %p246 = scmp.eq.s32.totalorder %s31, 0
      %p247 = por %p245, %p246
      %s248 = ssub.s32 %s25, %s32
      %p249 = scmp.eq.s32.totalorder %s248, 0
      %s251 = sadd.s32 %s250, 1
      %s252 = scalar_select %p249, %s250, %s251
      %p255 = pneg %p249
      %p256 = scmp.eq.s32.totalorder %s25, 1
      %p257 = por %p255, %p256
      %p258 = scmp.ne.s32.totalorder %s250, %s253
      %p259 = scmp.eq.s32.totalorder %s25, 0
      %p260 = por %p258, %p259
      %p261 = scmp.ne.s32.totalorder %s250, %s253
      %p262 = scmp.eq.s32.totalorder %s30, 1
      %p263 = por %p261, %p262
      %p264 = scmp.ne.s32.totalorder %s253, %s254
      %p265 = scmp.eq.s32.totalorder %s30, 0
      %p266 = por %p264, %p265
      %p267 = scmp.ne.s32.totalorder %s253, %s254
      %p268 = scmp.eq.s32.totalorder %s31, 1
      %p269 = por %p267, %p268
      %p271 = scmp.ne.s32.totalorder %s254, %s270
      %p272 = scmp.eq.s32.totalorder %s31, 0
      %p273 = por %p271, %p272
      %p274 = scmp.le.s32.totalorder 1, %s25
      %p275 = scmp.lt.s32.totalorder %s25, 3
      %p276 = pnand %p274, %p275
      %p277 = pneg %p276
      // Predicated region
      $region9: #{tpu_custom_call.1} parent=5 // pred_check
        _
      $region10: #{tpu_custom_call.1} parent=5 // pred_check_branch
        %279 = sbr.rel (%p276) target = $region12
      $region11: #{tpu_custom_call.1} parent=5 // pred_region
        %s280 = ssub.s32 %s25, 1
        // Predicated region
        $region13: #{tpu_custom_call.1} parent=11 // pred_check
          %p281 = pneg %p46
        $region14: #{tpu_custom_call.1} parent=11 // pred_check_branch
          %283 = sbr.rel (%p281) target = $region16
        $region15: #{tpu_custom_call.1} parent=11 // pred_region
          %285 = vsyncadd [#allocation4], 0
          %s287 = sshll.u32 %s0, 4
          %s288 = int_to_ptr.hbm [resolvable:$true] %s287
          %s289 = sshll.u32 [#allocation3], 4
          %s290 = int_to_ptr.vmem [resolvable:$true] %s289
          %292 = dma.hbm_to_vmem [thread:$0]  %s288, 64, %s290, [#allocation4]
        $region16: #{tpu_custom_call.1} parent=11 // pred_fallthru
          _
        // Predicated region
        $region17: #{tpu_custom_call.1} parent=11 // pred_check
          %p293 = pneg %p93
        $region18: #{tpu_custom_call.1} parent=11 // pred_check_branch
          %295 = sbr.rel (%p293) target = $region20
        $region19: #{tpu_custom_call.1} parent=11 // pred_region
          %297 = vsyncadd [#allocation7], 0
          %s298 = sshll.u32 %s2, 4
          %s299 = int_to_ptr.hbm [resolvable:$true] %s298
          %s300 = sshll.u32 [#allocation8], 4
          %s301 = int_to_ptr.vmem [resolvable:$true] %s300
          %306 = dma.hbm_to_vmem [thread:$0]  %s299, 256, %s301, [#allocation7], 64, 64, 4
        $region20: #{tpu_custom_call.1} parent=11 // pred_fallthru
          _
        // Predicated region
        $region21: #{tpu_custom_call.1} parent=11 // pred_check
          %p307 = pneg %p114
        $region22: #{tpu_custom_call.1} parent=11 // pred_check_branch
          %309 = sbr.rel (%p307) target = $region24
        $region23: #{tpu_custom_call.1} parent=11 // pred_region
          _
        $region24: #{tpu_custom_call.1} parent=11 // pred_fallthru
          _
        // Predicated region
        $region25: #{tpu_custom_call.1} parent=11 // pred_check
          %p310 = pneg %p135
        $region26: #{tpu_custom_call.1} parent=11 // pred_check_branch
          %312 = sbr.rel (%p310) target = $region28
        $region27: #{tpu_custom_call.1} parent=11 // pred_region
          %314 = vsyncadd [#allocation10], 0
          %s315 = sshll.u32 %s4, 4
          %s316 = int_to_ptr.hbm [resolvable:$true] %s315
          %s317 = sshll.u32 [#allocation9], 4
          %s318 = int_to_ptr.vmem [resolvable:$true] %s317
          %323 = dma.hbm_to_vmem [thread:$0]  %s316, 256, %s318, [#allocation10], 64, 64, 4
        $region28: #{tpu_custom_call.1} parent=11 // pred_fallthru
          _
        // Predicated region
        $region29: #{tpu_custom_call.1} parent=11 // pred_check
          %p324 = pneg %p156
        $region30: #{tpu_custom_call.1} parent=11 // pred_check_branch
          %326 = sbr.rel (%p324) target = $region32
        $region31: #{tpu_custom_call.1} parent=11 // pred_region
          _
        $region32: #{tpu_custom_call.1} parent=11 // pred_fallthru
          _
        // Predicated region
        $region33: #{tpu_custom_call.1} parent=11 // pred_check
          %p327 = pneg %p177
        $region34: #{tpu_custom_call.1} parent=11 // pred_check_branch
          %329 = sbr.rel (%p327) target = $region36
        $region35: #{tpu_custom_call.1} parent=11 // pred_region
          %331 = vsyncadd [#allocation10], 0
          %s332 = sshll.u32 %s6, 4
          %s333 = int_to_ptr.hbm [resolvable:$true] %s332
          %s334 = sshll.u32 [#allocation11], 4
          %s335 = int_to_ptr.vmem [resolvable:$true] %s334
          %340 = dma.hbm_to_vmem [thread:$0]  %s333, 256, %s335, [#allocation10], 64, 64, 4
        $region36: #{tpu_custom_call.1} parent=11 // pred_fallthru
          _
        // Predicated region
        $region37: #{tpu_custom_call.1} parent=11 // pred_check
          %p341 = pneg %p198
        $region38: #{tpu_custom_call.1} parent=11 // pred_check_branch
          %343 = sbr.rel (%p341) target = $region40
        $region39: #{tpu_custom_call.1} parent=11 // pred_region
          _
        $region40: #{tpu_custom_call.1} parent=11 // pred_fallthru
          _
        // Predicated region
        $region41: #{tpu_custom_call.1} parent=11 // pred_check
          %p344 = pneg %p219
        $region42: #{tpu_custom_call.1} parent=11 // pred_check_branch
          %346 = sbr.rel (%p344) target = $region44
        $region43: #{tpu_custom_call.1} parent=11 // pred_region
          %348 = vsyncadd [#allocation13], 0
          %s349 = sshll.u32 %s8, 4
          %s350 = int_to_ptr.hbm [resolvable:$true] %s349
          %s351 = sshll.u32 [#allocation12], 4
          %s352 = int_to_ptr.vmem [resolvable:$true] %s351
          %357 = dma.hbm_to_vmem [thread:$0]  %s350, 256, %s352, [#allocation13], 64, 64, 4
        $region44: #{tpu_custom_call.1} parent=11 // pred_fallthru
          _
        // Predicated region
        $region45: #{tpu_custom_call.1} parent=11 // pred_check
          %p358 = pneg %p240
        $region46: #{tpu_custom_call.1} parent=11 // pred_check_branch
          %360 = sbr.rel (%p358) target = $region48
        $region47: #{tpu_custom_call.1} parent=11 // pred_region
          _
        $region48: #{tpu_custom_call.1} parent=11 // pred_fallthru
          _
      $region12: #{tpu_custom_call.1} parent=5 // pred_fallthru
        _
      %p361 = scmp.lt.s32.totalorder %s25, 2
      // Predicated region
      $region49: #{tpu_custom_call.1} parent=5 // pred_check
        %p362 = pneg %p361
      $region50: #{tpu_custom_call.1} parent=5 // pred_check_branch
        %364 = sbr.rel (%p362) target = $region52
      $region51: #{tpu_custom_call.1} parent=5 // pred_region
        // Predicated region
        $region53: #{tpu_custom_call.1} parent=51 // pred_check
          %p365 = pneg %p66
        $region54: #{tpu_custom_call.1} parent=51 // pred_check_branch
          %367 = sbr.rel (%p365) target = $region56
        $region55: #{tpu_custom_call.1} parent=51 // pred_region
          %s368 = sand.u32 %s25, 1
          %s369 = scalar_lea.sflag [#allocation7], %s368
          %s370 = sand.u32 %s56, 1
          %s371 = smul.addr %s370, 8
          %s372 = scalar_lea.vmem [#allocation6], %s371
          %s373 = smul.u32 2, %s25
          %375 = vsyncadd %s369, 0
          %s376 = smul.addr %s373, 4
          %s377 = scalar_lea.hbm %s1, %s376
          %s378 = sshll.u32 %s377, 4
          %s379 = int_to_ptr.hbm [resolvable:$true] %s378
          %s380 = sshll.u32 %s372, 4
          %s381 = int_to_ptr.vmem [resolvable:$true] %s380
          %386 = dma.hbm_to_vmem [thread:$0]  %s379, 128, %s381, %s369, 64, 64, 4
        $region56: #{tpu_custom_call.1} parent=51 // pred_fallthru
          _
      $region52: #{tpu_custom_call.1} parent=5 // pred_fallthru
        _
      %p387 = scmp.le.s32.totalorder 1, %s25
      %p388 = scmp.lt.s32.totalorder %s25, 3
      %p389 = pnand %p387, %p388
      %p390 = pneg %p389
      // Predicated region
      $region57: #{tpu_custom_call.1} parent=5 // pred_check
        _
      $region58: #{tpu_custom_call.1} parent=5 // pred_check_branch
        %392 = sbr.rel (%p389) target = $region60
      $region59: #{tpu_custom_call.1} parent=5 // pred_region
        %s393 = ssub.s32 %s25, 1
        // Predicated region
        $region61: #{tpu_custom_call.1} parent=59 // pred_check
          %p394 = pneg %p46
        $region62: #{tpu_custom_call.1} parent=59 // pred_check_branch
          %396 = sbr.rel (%p394) target = $region64
        $region63: #{tpu_custom_call.1} parent=59 // pred_region
          %398 = dma.done [#allocation4], 64
        $region64: #{tpu_custom_call.1} parent=59 // pred_fallthru
          _
        %s399 = sand.u32 %s30, 1
        %s400 = scalar_lea.sflag [#allocation7], %s399
        %s401 = sand.u32 %s59, 1
        %s402 = smul.addr %s401, 8
        %s403 = scalar_lea.vmem [#allocation6], %s402
        // Predicated region
        $region65: #{tpu_custom_call.1} parent=59 // pred_check
          %p404 = pneg %p72
        $region66: #{tpu_custom_call.1} parent=59 // pred_check_branch
          %406 = sbr.rel (%p404) target = $region68
        $region67: #{tpu_custom_call.1} parent=59 // pred_region
          %408 = dma.done %s400, 128
        $region68: #{tpu_custom_call.1} parent=59 // pred_fallthru
          _
        // Predicated region
        $region69: #{tpu_custom_call.1} parent=59 // pred_check
          %p409 = pneg %p93
        $region70: #{tpu_custom_call.1} parent=59 // pred_check_branch
          %411 = sbr.rel (%p409) target = $region72
        $region71: #{tpu_custom_call.1} parent=59 // pred_region
          %413 = dma.done [#allocation7], 256
        $region72: #{tpu_custom_call.1} parent=59 // pred_fallthru
          _
        // Predicated region
        $region73: #{tpu_custom_call.1} parent=59 // pred_check
          %p414 = pneg %p135
        $region74: #{tpu_custom_call.1} parent=59 // pred_check_branch
          %416 = sbr.rel (%p414) target = $region76
        $region75: #{tpu_custom_call.1} parent=59 // pred_region
          %418 = dma.done [#allocation10], 256
        $region76: #{tpu_custom_call.1} parent=59 // pred_fallthru
          _
        // Predicated region
        $region77: #{tpu_custom_call.1} parent=59 // pred_check
          %p419 = pneg %p177
        $region78: #{tpu_custom_call.1} parent=59 // pred_check_branch
          %421 = sbr.rel (%p419) target = $region80
        $region79: #{tpu_custom_call.1} parent=59 // pred_region
          %423 = dma.done [#allocation10], 256
        $region80: #{tpu_custom_call.1} parent=59 // pred_fallthru
          _
        // Predicated region
        $region81: #{tpu_custom_call.1} parent=59 // pred_check
          %p424 = pneg %p219
        $region82: #{tpu_custom_call.1} parent=59 // pred_check_branch
          %426 = sbr.rel (%p424) target = $region84
        $region83: #{tpu_custom_call.1} parent=59 // pred_region
          %428 = dma.done [#allocation13], 256
        $region84: #{tpu_custom_call.1} parent=59 // pred_fallthru
          _
        %p429 = pneg %p46
        %p430 = pneg %p43
        %s431 = sand.u32 %s30, 1
        %s432 = scalar_lea.sflag [#allocation7], %s431
        %s433 = sand.u32 %s59, 1
        %s434 = smul.addr %s433, 8
        %s435 = scalar_lea.vmem [#allocation6], %s434
        %p436 = pneg %p72
        %p437 = pneg %p69
        %p438 = pneg %p93
        %p439 = pneg %p90
        %p440 = pneg %p114
        %p441 = pneg %p111
        %p442 = pneg %p135
        %p443 = pneg %p132
        %p444 = pneg %p156
        %p445 = pneg %p153
        %p446 = pneg %p177
        %p447 = pneg %p174
        %p448 = pneg %p198
        %p449 = pneg %p195
        %p450 = pneg %p219
        %p451 = pneg %p216
        %p452 = pneg %p240
        %p453 = pneg %p237
        %p454 = pneg %p266
        %p455 = pneg %p263
        %s456 = sand.u32 %s253, 1
        %s457 = scalar_lea.sflag [#allocation5], %s456
        %s458 = sand.u32 %s253, 1
        %s459 = smul.addr %s458, 8
        %s460 = scalar_lea.vmem [#allocation14], %s459
        %s461 = smul.u32 2, %s30
        %v463 = vld [vmem:[#allocation3] sm:$0xf]
        %v464 = vld [vmem:[%s403] sm:$0xf]
        %v465 = vld [vmem:[%s403 + $0x4] sm:$0xf]
        %v466 = vld [vmem:[#allocation8] sm:$0xf]
        %v467 = vld [vmem:[#allocation8 + $0x4] sm:$0xf]
        %v468 = vld [vmem:[#allocation8 + $0x8] sm:$0xf]
        %v469 = vld [vmem:[#allocation8 + $0xc] sm:$0xf]
        %v470 = vld [vmem:[%s3] sm:$0x1]
        %v472 = vperm.slane %v470, 0
        %v478 = vunpack.c.l.b16 %v466
        %v479 = vunpack.c.l.b16 %v467
        %v480 = vunpack.c.l.b16 %v468
        %v481 = vunpack.c.l.b16 %v469
        %v482 = vpack.c.b16 %v479, %v478
        %v483 = vpack.c.b16 %v481, %v480
        %vm486 = vcmask 261120
        %v488 = vsel %vm486, %v463, 0
        %490 = vmatpush.bf16.msra.mxu0 0
        %491 = vmatpush.bf16.msra.mxu0 0
        %492 = vmatpush.bf16.msra.mxu0 0
        %493 = vmatpush.bf16.msra.mxu0 0
        %494 = vmatpush.bf16.msra.mxu0 0
        %495 = vmatpush.bf16.msra.mxu0 0
        %496 = vmatpush.bf16.msra.mxu0 %v483
        %497 = vmatpush.bf16.msra.mxu0 %v482
        %498 = vmatmul.bf16.gmra.mxu0 %v488
        %v499 = vpop.f32.mrf.mxu0
        %v500 = vadd.f32 %v472, %v499
        %v501 = vpop.f32.mrf.mxu0
        %502 = vdwg.mxu0
        %v503 = vld [vmem:[#allocation9] sm:$0xf]
        %v504 = vld [vmem:[#allocation9 + $0x4] sm:$0xf]
        %v505 = vld [vmem:[#allocation9 + $0x8] sm:$0xf]
        %v506 = vld [vmem:[#allocation9 + $0xc] sm:$0xf]
        %v507 = vld [vmem:[%s5] sm:$0x1]
        %v509 = vperm.slane %v507, 0
        %v513 = vunpack.c.l.b16 %v464
        %v514 = vunpack.c.l.b16 %v465
        %v515 = vpack.c.b16 %v514, %v513
        %v520 = vunpack.c.l.b16 %v503
        %v521 = vunpack.c.l.b16 %v504
        %v522 = vunpack.c.l.b16 %v505
        %v523 = vunpack.c.l.b16 %v506
        %v524 = vpack.c.b16 %v521, %v520
        %v525 = vpack.c.b16 %v523, %v522
        %v529 = vsel %vm486, %v515, 0
        %531 = vmatpush.bf16.msra.mxu0 0
        %532 = vmatpush.bf16.msra.mxu0 0
        %533 = vmatpush.bf16.msra.mxu0 0
        %534 = vmatpush.bf16.msra.mxu0 0
        %535 = vmatpush.bf16.msra.mxu0 0
        %536 = vmatpush.bf16.msra.mxu0 0
        %537 = vmatpush.bf16.msra.mxu0 %v525
        %538 = vmatpush.bf16.msra.mxu0 %v524
        %539 = vmatmul.bf16.gmra.mxu0 %v529
        %v540 = vpop.f32.mrf.mxu0
        %v541 = vadd.f32 %v509, %v540
        %v542 = vpop.f32.mrf.mxu0
        %v543 = vadd.f32 %v509, %v542
        %544 = vdwg.mxu0
        %v545 = vld [vmem:[#allocation11] sm:$0xf]
        %v546 = vld [vmem:[#allocation11 + $0x4] sm:$0xf]
        %v547 = vld [vmem:[#allocation11 + $0x8] sm:$0xf]
        %v548 = vld [vmem:[#allocation11 + $0xc] sm:$0xf]
        %v549 = vld [vmem:[%s7] sm:$0x1]
        %v551 = vperm.slane %v549, 0
        %v557 = vunpack.c.l.b16 %v545
        %v558 = vunpack.c.l.b16 %v546
        %v559 = vunpack.c.l.b16 %v547
        %v560 = vunpack.c.l.b16 %v548
        %v561 = vpack.c.b16 %v558, %v557
        %v562 = vpack.c.b16 %v560, %v559
        %565 = vmatpush.bf16.msra.mxu0 0
        %566 = vmatpush.bf16.msra.mxu0 0
        %567 = vmatpush.bf16.msra.mxu0 0
        %568 = vmatpush.bf16.msra.mxu0 0
        %569 = vmatpush.bf16.msra.mxu0 0
        %570 = vmatpush.bf16.msra.mxu0 0
        %571 = vmatpush.bf16.msra.mxu0 %v562
        %572 = vmatpush.bf16.msra.mxu0 %v561
        %573 = vmatmul.bf16.gmra.mxu0 %v529
        %v574 = vpop.f32.mrf.mxu0
        %v575 = vadd.f32 %v551, %v574
        %v576 = vpop.f32.mrf.mxu0
        %v577 = vadd.f32 %v551, %v576
        %578 = vdwg.mxu0
        %vm579 = vcmask 64512
        %v581 = vsel %vm579, %v500, 0
        %v584 = vsel %vm579, %v541, 0
        %v587 = vsel %vm579, %v543, 0
        %589 = vmatpush.xpose.msra.mxu0 0.0
        %590 = vmatpush.xpose.msra.mxu0 0.0
        %591 = vmatpush.xpose.msra.mxu0 0.0
        %592 = vmatpush.xpose.msra.mxu0 0.0
        %593 = vmatpush.xpose.msra.mxu0 0.0
        %594 = vmatpush.xpose.msra.mxu0 0.0
        %595 = vmatpush.xpose.msra.mxu0 0.0
        %596 = vmatpush.xpose.msra.mxu0 0.0
        %597 = vmatpush.xpose.msra.mxu0 0.0
        %598 = vmatpush.xpose.msra.mxu0 0.0
        %599 = vmatpush.xpose.msra.mxu0 0.0
        %600 = vmatpush.xpose.msra.mxu0 0.0
        %601 = vmatpush.xpose.msra.mxu0 0.0
        %602 = vmatpush.xpose.msra.mxu0 0.0
        %603 = vmatpush.xpose.msra.mxu0 %v587
        %604 = vmatpush.xpose.msra.mxu0 %v584
        %605 = vmatmul.f32.gmra.mxu0 %v581
        %v606 = vpop.f32.mrf.mxu0
        %v607 = vadd.f32 0.0, %v606
        %608 = vdwg.mxu0
        %vm609 = vcmask 130048
        %v610 = vsel %vm609, %v607, -inf
        %611 = vmax.xlane.f32.xlu0 %v610
        %v612 = vpop.xlane.xlu0 %611
        %v613 = vsub.f32 %v607, %v612
        %v614 = vmul.f32 %v613, 1.442695
        %v615 = vpow.pop %v614
        %v616 = vsel %vm609, %v615, 0.0
        %617 = vadd.xlane.f32.xlu0 %v616
        %v618 = vpop.xlane.xlu0 %617
        %v620 = vsel %vm609, %v615, 0
        %622 = vmatpush.msra.mxu0 0.0
        %623 = vmatpush.msra.mxu0 0.0
        %624 = vmatpush.msra.mxu0 0.0
        %625 = vmatpush.msra.mxu0 0.0
        %626 = vmatpush.msra.mxu0 0.0
        %627 = vmatpush.msra.mxu0 0.0
        %628 = vmatpush.msra.mxu0 0.0
        %629 = vmatpush.msra.mxu0 0.0
        %630 = vmatpush.msra.mxu0 0.0
        %631 = vmatpush.msra.mxu0 0.0
        %632 = vmatpush.msra.mxu0 0.0
        %633 = vmatpush.msra.mxu0 0.0
        %634 = vmatpush.msra.mxu0 0.0
        %635 = vmatpush.msra.mxu0 0.0
        %636 = vmatpush.msra.mxu0 %v577
        %637 = vmatpush.msra.mxu0 %v575
        %638 = vmatmul.f32.gmra.mxu0 %v620
        %v639 = vpop.f32.mrf.mxu0
        %v640 = vadd.f32 0.0, %v639
        %641 = vdwg.mxu0
        %v642 = vrcp.pop %v618
        %v643 = vmul.f32 %v640, %v642
        %v644 = vadd.f32 %v500, %v643
        %645 = vst.msk [vmem:[#allocation2] sm:$0xff] %vm579, %v644
        %646 = vrot.lane.b32.xlu0 %v500, 120
        %v647 = vpop.permute.xlu0 %646
        %648 = vrot.lane.b32.xlu0 %v541, 120
        %v649 = vpop.permute.xlu0 %648
        %650 = vrot.lane.b32.xlu0 %v543, 120
        %v651 = vpop.permute.xlu0 %650
        %v652 = vsel %vm579, %v647, 0
        %v654 = vsel %vm579, %v649, 0
        %v656 = vsel %vm579, %v651, 0
        %658 = vmatpush.xpose.msra.mxu0 0.0
        %659 = vmatpush.xpose.msra.mxu0 0.0
        %660 = vmatpush.xpose.msra.mxu0 0.0
        %661 = vmatpush.xpose.msra.mxu0 0.0
        %662 = vmatpush.xpose.msra.mxu0 0.0
        %663 = vmatpush.xpose.msra.mxu0 0.0
        %664 = vmatpush.xpose.msra.mxu0 0.0
        %665 = vmatpush.xpose.msra.mxu0 0.0
        %666 = vmatpush.xpose.msra.mxu0 0.0
        %667 = vmatpush.xpose.msra.mxu0 0.0
        %668 = vmatpush.xpose.msra.mxu0 0.0
        %669 = vmatpush.xpose.msra.mxu0 0.0
        %670 = vmatpush.xpose.msra.mxu0 0.0
        %671 = vmatpush.xpose.msra.mxu0 0.0
        %672 = vmatpush.xpose.msra.mxu0 %v656
        %673 = vmatpush.xpose.msra.mxu0 %v654
        %674 = vmatmul.f32.gmra.mxu0 %v652
        %v675 = vpop.f32.mrf.mxu0
        %v676 = vadd.f32 0.0, %v675
        %677 = vdwg.mxu0
        %v678 = vsel %vm609, %v676, -inf
        %679 = vmax.xlane.f32.xlu0 %v678
        %v680 = vpop.xlane.xlu0 %679
        %v681 = vsub.f32 %v676, %v680
        %v682 = vmul.f32 %v681, 1.442695
        %v683 = vpow.pop %v682
        %v684 = vsel %vm609, %v683, 0.0
        %685 = vadd.xlane.f32.xlu0 %v684
        %v686 = vpop.xlane.xlu0 %685
        %689 = vrot.lane.b32.xlu0 %v575, 120
        %v690 = vpop.permute.xlu0 %689
        %691 = vrot.lane.b32.xlu0 %v577, 120
        %v692 = vpop.permute.xlu0 %691
        %v696 = vsel %vm609, %v683, 0
        %698 = vmatpush.msra.mxu0 0.0
        %699 = vmatpush.msra.mxu0 0.0
        %700 = vmatpush.msra.mxu0 0.0
        %701 = vmatpush.msra.mxu0 0.0
        %702 = vmatpush.msra.mxu0 0.0
        %703 = vmatpush.msra.mxu0 0.0
        %704 = vmatpush.msra.mxu0 0.0
        %705 = vmatpush.msra.mxu0 0.0
        %706 = vmatpush.msra.mxu0 0.0
        %707 = vmatpush.msra.mxu0 0.0
        %708 = vmatpush.msra.mxu0 0.0
        %709 = vmatpush.msra.mxu0 0.0
        %710 = vmatpush.msra.mxu0 0.0
        %711 = vmatpush.msra.mxu0 0.0
        %712 = vmatpush.msra.mxu0 %v692
        %713 = vmatpush.msra.mxu0 %v690
        %714 = vmatmul.f32.gmra.mxu0 %v696
        %v715 = vpop.f32.mrf.mxu0
        %v716 = vadd.f32 0.0, %v715
        %717 = vdwg.mxu0
        %v718 = vrcp.pop %v686
        %v719 = vmul.f32 %v716, %v718
        %721 = vrot.lane.b32.xlu0 %v719, 8
        %v722 = vpop.permute.xlu0 %721
        %v724 = vadd.f32 %v500, %v722
        %vm725 = vcmask 130112
        %726 = vst.msk [vmem:[#allocation2] sm:$0xff] %vm725, %v724
        %727 = vrot.lane.b32.xlu0 %v500, 112
        %v728 = vpop.permute.xlu0 %727
        %729 = vrot.lane.b32.xlu0 %v541, 112
        %v730 = vpop.permute.xlu0 %729
        %731 = vrot.lane.b32.xlu0 %v543, 112
        %v732 = vpop.permute.xlu0 %731
        %v733 = vsel %vm579, %v728, 0
        %v735 = vsel %vm579, %v730, 0
        %v737 = vsel %vm579, %v732, 0
        %739 = vmatpush.xpose.msra.mxu0 0.0
        %740 = vmatpush.xpose.msra.mxu0 0.0
        %741 = vmatpush.xpose.msra.mxu0 0.0
        %742 = vmatpush.xpose.msra.mxu0 0.0
        %743 = vmatpush.xpose.msra.mxu0 0.0
        %744 = vmatpush.xpose.msra.mxu0 0.0
        %745 = vmatpush.xpose.msra.mxu0 0.0
        %746 = vmatpush.xpose.msra.mxu0 0.0
        %747 = vmatpush.xpose.msra.mxu0 0.0
        %748 = vmatpush.xpose.msra.mxu0 0.0
        %749 = vmatpush.xpose.msra.mxu0 0.0
        %750 = vmatpush.xpose.msra.mxu0 0.0
        %751 = vmatpush.xpose.msra.mxu0 0.0
        %752 = vmatpush.xpose.msra.mxu0 0.0
        %753 = vmatpush.xpose.msra.mxu0 %v737
        %754 = vmatpush.xpose.msra.mxu0 %v735
        %755 = vmatmul.f32.gmra.mxu0 %v733
        %v756 = vpop.f32.mrf.mxu0
        %v757 = vadd.f32 0.0, %v756
        %758 = vdwg.mxu0
        %v759 = vsel %vm609, %v757, -inf
        %760 = vmax.xlane.f32.xlu0 %v759
        %v761 = vpop.xlane.xlu0 %760
        %v762 = vsub.f32 %v757, %v761
        %v763 = vmul.f32 %v762, 1.442695
        %v764 = vpow.pop %v763
        %v765 = vsel %vm609, %v764, 0.0
        %766 = vadd.xlane.f32.xlu0 %v765
        %v767 = vpop.xlane.xlu0 %766
        %768 = vrot.lane.b32.xlu0 %v575, 112
        %v769 = vpop.permute.xlu0 %768
        %770 = vrot.lane.b32.xlu0 %v577, 112
        %v771 = vpop.permute.xlu0 %770
        %v775 = vsel %vm609, %v764, 0
        %777 = vmatpush.msra.mxu0 0.0
        %778 = vmatpush.msra.mxu0 0.0
        %779 = vmatpush.msra.mxu0 0.0
        %780 = vmatpush.msra.mxu0 0.0
        %781 = vmatpush.msra.mxu0 0.0
        %782 = vmatpush.msra.mxu0 0.0
        %783 = vmatpush.msra.mxu0 0.0
        %784 = vmatpush.msra.mxu0 0.0
        %785 = vmatpush.msra.mxu0 0.0
        %786 = vmatpush.msra.mxu0 0.0
        %787 = vmatpush.msra.mxu0 0.0
        %788 = vmatpush.msra.mxu0 0.0
        %789 = vmatpush.msra.mxu0 0.0
        %790 = vmatpush.msra.mxu0 0.0
        %791 = vmatpush.msra.mxu0 %v771
        %792 = vmatpush.msra.mxu0 %v769
        %793 = vmatmul.f32.gmra.mxu0 %v775
        %v794 = vpop.f32.mrf.mxu0
        %v795 = vadd.f32 0.0, %v794
        %796 = vdwg.mxu0
        %v797 = vrcp.pop %v767
        %v798 = vmul.f32 %v795, %v797
        %800 = vrot.lane.b32.xlu0 %v798, 16
        %v801 = vpop.permute.xlu0 %800
        %v803 = vadd.f32 %v500, %v801
        %vm804 = vcmask 195712
        %805 = vst.msk [vmem:[#allocation2] sm:$0xff] %vm804, %v803
        %806 = vrot.lane.b32.xlu0 %v500, 104
        %v807 = vpop.permute.xlu0 %806
        %808 = vrot.lane.b32.xlu0 %v541, 104
        %v809 = vpop.permute.xlu0 %808
        %810 = vrot.lane.b32.xlu0 %v543, 104
        %v811 = vpop.permute.xlu0 %810
        %v812 = vsel %vm579, %v807, 0
        %v814 = vsel %vm579, %v809, 0
        %v816 = vsel %vm579, %v811, 0
        %818 = vmatpush.xpose.msra.mxu0 0.0
        %819 = vmatpush.xpose.msra.mxu0 0.0
        %820 = vmatpush.xpose.msra.mxu0 0.0
        %821 = vmatpush.xpose.msra.mxu0 0.0
        %822 = vmatpush.xpose.msra.mxu0 0.0
        %823 = vmatpush.xpose.msra.mxu0 0.0
        %824 = vmatpush.xpose.msra.mxu0 0.0
        %825 = vmatpush.xpose.msra.mxu0 0.0
        %826 = vmatpush.xpose.msra.mxu0 0.0
        %827 = vmatpush.xpose.msra.mxu0 0.0
        %828 = vmatpush.xpose.msra.mxu0 0.0
        %829 = vmatpush.xpose.msra.mxu0 0.0
        %830 = vmatpush.xpose.msra.mxu0 0.0
        %831 = vmatpush.xpose.msra.mxu0 0.0
        %832 = vmatpush.xpose.msra.mxu0 %v816
        %833 = vmatpush.xpose.msra.mxu0 %v814
        %834 = vmatmul.f32.gmra.mxu0 %v812
        %v835 = vpop.f32.mrf.mxu0
        %v836 = vadd.f32 0.0, %v835
        %837 = vdwg.mxu0
        %v838 = vsel %vm609, %v836, -inf
        %839 = vmax.xlane.f32.xlu0 %v838
        %v840 = vpop.xlane.xlu0 %839
        %v841 = vsub.f32 %v836, %v840
        %v842 = vmul.f32 %v841, 1.442695
        %v843 = vpow.pop %v842
        %v844 = vsel %vm609, %v843, 0.0
        %845 = vadd.xlane.f32.xlu0 %v844
        %v846 = vpop.xlane.xlu0 %845
        %847 = vrot.lane.b32.xlu0 %v575, 104
        %v848 = vpop.permute.xlu0 %847
        %849 = vrot.lane.b32.xlu0 %v577, 104
        %v850 = vpop.permute.xlu0 %849
        %v854 = vsel %vm609, %v843, 0
        %856 = vmatpush.msra.mxu0 0.0
        %857 = vmatpush.msra.mxu0 0.0
        %858 = vmatpush.msra.mxu0 0.0
        %859 = vmatpush.msra.mxu0 0.0
        %860 = vmatpush.msra.mxu0 0.0
        %861 = vmatpush.msra.mxu0 0.0
        %862 = vmatpush.msra.mxu0 0.0
        %863 = vmatpush.msra.mxu0 0.0
        %864 = vmatpush.msra.mxu0 0.0
        %865 = vmatpush.msra.mxu0 0.0
        %866 = vmatpush.msra.mxu0 0.0
        %867 = vmatpush.msra.mxu0 0.0
        %868 = vmatpush.msra.mxu0 0.0
        %869 = vmatpush.msra.mxu0 0.0
        %870 = vmatpush.msra.mxu0 %v850
        %871 = vmatpush.msra.mxu0 %v848
        %872 = vmatmul.f32.gmra.mxu0 %v854
        %v873 = vpop.f32.mrf.mxu0
        %v874 = vadd.f32 0.0, %v873
        %875 = vdwg.mxu0
        %v876 = vrcp.pop %v846
        %v877 = vmul.f32 %v874, %v876
        %879 = vrot.lane.b32.xlu0 %v877, 24
        %v880 = vpop.permute.xlu0 %879
        %v882 = vadd.f32 %v500, %v880
        %vm883 = vcmask 261312
        %884 = vst.msk [vmem:[#allocation2] sm:$0xff] %vm883, %v882
        %v885 = vld [vmem:[#allocation2] sm:$0xff]
        %v886 = vpack.c.bf16 %v885, %v885
        %v887 = vld [vmem:[#allocation12] sm:$0xf]
        %v888 = vld [vmem:[#allocation12 + $0x4] sm:$0xf]
        %v889 = vld [vmem:[#allocation12 + $0x8] sm:$0xf]
        %v890 = vld [vmem:[#allocation12 + $0xc] sm:$0xf]
        %v891 = vld [vmem:[%s9] sm:$0x1]
        %v893 = vperm.slane %v891, 0
        %v899 = vunpack.c.l.b16 %v887
        %v900 = vunpack.c.l.b16 %v888
        %v901 = vunpack.c.l.b16 %v889
        %v902 = vunpack.c.l.b16 %v890
        %v903 = vpack.c.b16 %v900, %v899
        %v904 = vpack.c.b16 %v902, %v901
        %v908 = vsel %vm486, %v886, 0
        %910 = vmatpush.bf16.msra.mxu0 0
        %911 = vmatpush.bf16.msra.mxu0 0
        %912 = vmatpush.bf16.msra.mxu0 0
        %913 = vmatpush.bf16.msra.mxu0 0
        %914 = vmatpush.bf16.msra.mxu0 0
        %915 = vmatpush.bf16.msra.mxu0 0
        %916 = vmatpush.bf16.msra.mxu0 %v904
        %917 = vmatpush.bf16.msra.mxu0 %v903
        %918 = vmatmul.bf16.gmra.mxu0 %v908
        %v919 = vpop.f32.mrf.mxu0
        %v920 = vadd.f32 %v893, %v919
        %v921 = vpop.f32.mrf.mxu0
        %922 = vdwg.mxu0
        %v923 = vxor.u32 %v920, 2147483648
        %v924 = vmul.f32 %v923, 1.442695
        %v925 = vpow.pop %v924
        %v926 = vadd.f32 %v925, 1.0
        %v927 = vrcp.pop %v926
        %v928 = vmul.f32 %v926, %v927
        %v929 = vsub.f32 1.0, %v928
        %v930 = vmul.f32 %v927, %v929
        %v931 = vadd.f32 %v927, %v930
        %vm932 = vweird.f32 %v926
        %vm933 = vweird.f32 %v927
        %vm934 = vmor %vm932, %vm933
        %v935 = vsel %vm934, %v927, %v931
        %v936 = vand.u32 2147483647, %v926
        %vm937 = vcmp.eq.f32.partialorder %v936, 8.507059e+37
        %v938 = vand.u32 %v926, 2147483648
        %v939 = vor.u32 1.1754944e-38, %v938
        %v940 = vsel %vm937, %v939, %v935
        %v941 = vmul.f32 1.0, %v940
        %v942 = vadd.f32 %v885, %v941
        %943 = vst.msk [vmem:[%s460] sm:$0xff] %vm486, %v942
        %s944 = sand.u32 %s253, 1
        %s945 = scalar_lea.sflag [#allocation5], %s944
        %s946 = sand.u32 %s253, 1
        %s947 = smul.addr %s946, 8
        %s948 = scalar_lea.vmem [#allocation14], %s947
        // Predicated region
        $region85: #{tpu_custom_call.1} parent=59 // pred_check
          %p949 = pneg %p263
        $region86: #{tpu_custom_call.1} parent=59 // pred_check_branch
          %951 = sbr.rel (%p949) target = $region88
        $region87: #{tpu_custom_call.1} parent=59 // pred_region
          %953 = vsyncadd %s945, 0
          %s954 = smul.addr %s30, 8
          %s955 = scalar_lea.hbm %s10, %s954
          %s957 = sshll.u32 %s948, 4
          %s958 = int_to_ptr.vmem [resolvable:$true] %s957
          %s959 = sshll.u32 %s955, 4
          %s960 = int_to_ptr.hbm [resolvable:$true] %s959
          %962 = dma.vmem_to_hbm [thread:$0]  %s958, 128, %s960, %s945
        $region88: #{tpu_custom_call.1} parent=59 // pred_fallthru
          _
      $region60: #{tpu_custom_call.1} parent=5 // pred_fallthru
        _
      %p963 = scmp.le.s32.totalorder 2, %s25
      // Predicated region
      $region89: #{tpu_custom_call.1} parent=5 // pred_check
        %p964 = pneg %p963
      $region90: #{tpu_custom_call.1} parent=5 // pred_check_branch
        %966 = sbr.rel (%p964) target = $region92
      $region91: #{tpu_custom_call.1} parent=5 // pred_region
        %s967 = ssub.s32 %s25, 2
        // Predicated region
        $region93: #{tpu_custom_call.1} parent=91 // pred_check
          %p968 = pneg %p269
        $region94: #{tpu_custom_call.1} parent=91 // pred_check_branch
          %970 = sbr.rel (%p968) target = $region96
        $region95: #{tpu_custom_call.1} parent=91 // pred_region
          %s971 = sand.u32 %s254, 1
          %s972 = scalar_lea.sflag [#allocation5], %s971
          %s973 = sand.u32 %s254, 1
          %s974 = smul.addr %s973, 8
          %s975 = scalar_lea.vmem [#allocation14], %s974
          %977 = dma.done %s972, 128
        $region96: #{tpu_custom_call.1} parent=91 // pred_fallthru
          _
      $region92: #{tpu_custom_call.1} parent=5 // pred_fallthru
        _
    $region6: #{tpu_custom_call.1} parent=1 // loop_footer
      %s29 = sadd.s32 1, %s25
    $region7: #{tpu_custom_call.1} parent=1 // loop_footer_branch
      %24 = sbr.rel target = $region3
    $region8: #{tpu_custom_call.1} parent=1 // loop_exit
      _
    %978 = vsyncpa [#allocation4], 1
    %s979 = scalar_lea.sflag [#allocation4], 1
    %980 = vsyncpa %s979, 1
    %981 = vsyncpa [#allocation7], 1
    %s982 = scalar_lea.sflag [#allocation7], 1
    %983 = vsyncpa %s982, 1
    %984 = vsyncpa [#allocation10], 1
    %985 = vsyncpa [#allocation13], 1
    %986 = vsyncpa [#allocation5], 1
    %s987 = scalar_lea.sflag [#allocation5], 1
    %988 = vsyncpa %s987, 1

</llo_original>
